<compile_context>
chip_gen: v6e
topology: v6e:2x2x1
jax: 0.10.0
libtpu: 0.0.40
codegen_flags: <defaults>
</compile_context>

<pallas_src>
import functools
import math

import jax
import jax.numpy as jnp
from jax import lax
from jax.experimental import pallas as pl
from jax.experimental.pallas import tpu as pltpu


# ----------------------------- parameter setup ------------------------------
def make_positional_encoding(max_len: int, d_model: int, dtype=jnp.float32):
    """Replicates the buffer built in PositionalEncoding.__init__ (deterministic)."""
    position = jnp.arange(max_len, dtype=jnp.float32)[:, None]                 # (L, 1)
    div_term = jnp.exp(
        jnp.arange(0, d_model, 2, dtype=jnp.float32) * (-math.log(10000.0) / d_model)
    )                                                                           # (D/2,)
    pe = jnp.zeros((max_len, d_model), dtype=jnp.float32)
    pe = pe.at[:, 0::2].set(jnp.sin(position * div_term))
    pe = pe.at[:, 1::2].set(jnp.cos(position * div_term))
    # pe.unsqueeze(0).transpose(0, 1) -> (max_len, 1, d_model), as in the module.
    return pe[:, None, :].astype(dtype)


# ------------------------------ fallback RNG ---------------------------------
def _fmix32(x):
    """murmur3 finalizer: well-mixed uint32 -> uint32, pure VPU integer ops."""
    x = x ^ (x >> 16)
    x = x * jnp.uint32(0x85EBCA6B)
    x = x ^ (x >> 13)
    x = x * jnp.uint32(0xC2B2AE35)
    x = x ^ (x >> 16)
    return x


# --------------------------------- kernel -----------------------------------
def _pe_add_dropout_kernel(seed_ref, x_ref, pe_ref, o_ref, *,
                           p, training, batch, seq_tile, use_hw_prng):
    # x_ref : (TS, B*D)   pe_ref : (TS, D)   o_ref : (TS, B*D)
    x = x_ref[...]
    pe_tile = pe_ref[...]
    # Broadcast pe over the batch groups along the lane axis (D is lane-aligned).
    pe_row = pe_tile if batch == 1 else jnp.concatenate([pe_tile] * batch, axis=-1)
    y = x + pe_row.astype(x.dtype)

    if training and p > 0.0:
        shape = x.shape
        if use_hw_prng:
            # Hardware PRNG: deterministic per (seed, grid step), ~3-4 ops/elem.
            pltpu.prng_seed(seed_ref[0], pl.program_id(0))
            bits = pltpu.bitcast(pltpu.prng_random_bits(shape), jnp.uint32)
        else:
            # Stateless counter-based fallback (interpret mode / non-TPU):
            # one lane iota + one row iota, then hash of the linear index.
            seq_off = (pl.program_id(0) * seq_tile).astype(jnp.uint32)
            row = lax.broadcasted_iota(jnp.uint32, shape, 0) + seq_off
            col = lax.broadcasted_iota(jnp.uint32, shape, 1)
            lin = row * jnp.uint32(shape[1]) + col
            seed = seed_ref[0].astype(jnp.uint32)
            bits = _fmix32((lin * jnp.uint32(0x9E3779B1)) ^ (seed * jnp.uint32(0x85EBCA77)))

        # Integer-domain keep test: P(bits >= thresh) == 1 - p (to 2^-32).
        thresh = jnp.uint32(min(int(round(p * 2.0 ** 32)), 2 ** 32 - 1))
        keep = bits >= thresh
        # select + scale in f32 so 1/(1-p) isn't pre-rounded to bf16; cast at store.
        gate = jnp.where(keep, jnp.float32(1.0 / (1.0 - p)), jnp.float32(0.0))
        y = y.astype(jnp.float32) * gate

    o_ref[...] = y.astype(o_ref.dtype)


# ----------------------------- tile selection --------------------------------
def _choose_seq_tile(S, row_bytes, budget_bytes):
    """Largest multiple-of-8 divisor of S that fits the per-block budget and
    leaves the grid with multiple steps when S allows it."""
    rows = max(8, budget_bytes // max(1, row_bytes))
    if S >= 16:
        rows = min(rows, max(8, S // 4))     # aim for >= 2-4 grid steps
    cands = [t for t in range(8, S + 1, 8) if S % t == 0]
    fitting = [t for t in cands if t <= rows]
    if fitting:
        return fitting[-1]
    if cands:
        return cands[0]
    return S                                  # S not a multiple of 8: full-extent block


# -------------------------------- wrapper ------------------------------------
def positional_encoding_forward(
    x,
    pe,
    *,
    p=0.1,
    training=True,
    seed=0,
    seq_tile=None,
    use_hw_prng=None,
    block_budget_bytes=4 << 20,               # ~4 MiB x blocks (v7x HBM roofline)
    vmem_limit_bytes=32 * 1024 * 1024,        # fits v5e/v6e (128 MiB) and v7x (64 MiB)
    donate_x=False,
):
    """x: (S, B, D); pe: (max_len, 1, D) or (max_len, D). Returns dropout(x + pe[:S])."""
    S, B, D = x.shape
    assert 0.0 <= p < 1.0, "dropout p must be in [0, 1)"
    pe2d = pe.reshape(pe.shape[0], -1)
    assert pe.shape[0] >= S and pe2d.shape[1] == D
    pe_s = pe2d[:S].astype(x.dtype)            # (S, D): sublane/lane-dense pe slab

    if use_hw_prng is None:
        use_hw_prng = jax.default_backend() == "tpu"

    # Collapse (B, D) into the lane axis: free metadata reshape on contiguous x.
    x2d = x.reshape(S, B * D)

    itemsize = jnp.dtype(x.dtype).itemsize
    if seq_tile is None:
        seq_tile = _choose_seq_tile(S, B * D * itemsize, block_budget_bytes)
    assert S % seq_tile == 0

    seed_arr = jnp.asarray([seed], dtype=jnp.int32)
    kernel = functools.partial(
        _pe_add_dropout_kernel, p=float(p), training=bool(training),
        batch=int(B), seq_tile=int(seq_tile), use_hw_prng=bool(use_hw_prng),
    )

    bytes_accessed = (2 * S * B * D + S * D) * itemsize   # read x + write out + read pe
    cost = pl.CostEstimate(flops=4 * S * B * D, transcendentals=0,
                           bytes_accessed=bytes_accessed)

    out2d = pl.pallas_call(
        kernel,
        out_shape=jax.ShapeDtypeStruct((S, B * D), x.dtype),
        grid_spec=pltpu.PrefetchScalarGridSpec(
            num_scalar_prefetch=1,                        # seed lives in SMEM
            grid=(S // seq_tile,),
            in_specs=[
                pl.BlockSpec((seq_tile, B * D), lambda i, seed: (i, 0)),
                pl.BlockSpec((seq_tile, D), lambda i, seed: (i, 0)),
            ],
            out_specs=pl.BlockSpec((seq_tile, B * D), lambda i, seed: (i, 0)),
        ),
        compiler_params=pltpu.CompilerParams(
            dimension_semantics=("parallel",),            # independent steps -> megacore
            vmem_limit_bytes=vmem_limit_bytes,
        ),
        cost_estimate=cost,
        # x2d is call-arg index 1 (after the scalar-prefetch seed); alias to out 0.
        input_output_aliases=({1: 0} if donate_x else {}),
    )(seed_arr, x2d, pe_s)
    return out2d.reshape(S, B, D)


# ---------------------------------- main -------------------------------------
if __name__ == "__main__":
    # Small shapes consistent with the module: (seq, batch, d_model), d_model=768.
    S, B, D = 8, 2, 768
    MAX_LEN = 300
    P_DROP = 0.1

    key = jax.random.PRNGKey(0)
    x = jax.random.normal(key, (S, B, D), dtype=jnp.float32)
    pe = make_positional_encoding(MAX_LEN, D, dtype=jnp.float32)   # (max_len, 1, D)

    ref = x + pe[:S]   # broadcast over batch

    # Eval-mode pass (dropout = identity): check against pure-JAX reference.
    y_eval = positional_encoding_forward(x, pe, p=P_DROP, training=False)
    y_eval = jax.block_until_ready(y_eval)
    assert jnp.allclose(y_eval, ref, atol=1e-6), "eval-mode mismatch vs reference"

    # Train-mode pass (hardware-PRNG dropout on TPU, deterministic per seed/step).
    y_train = positional_encoding_forward(x, pe, p=P_DROP, training=True, seed=0)
    y_train = jax.block_until_ready(y_train)
    assert y_train.shape == (S, B, D)

    # Surviving elements equal (x + pe) / (1 - p); dropped ones are exactly 0.
    scaled = ref * (1.0 / (1.0 - P_DROP))
    ok = jnp.logical_or(jnp.isclose(y_train, scaled, atol=1e-5), y_train == 0.0)
    assert bool(jnp.all(ok)), "train-mode dropout values inconsistent"

    # Drop fraction should be roughly p (very loose band: >20 sigma margin).
    drop_frac = float(jnp.mean((y_train == 0.0).astype(jnp.float32)))
    assert 0.04 < drop_frac < 0.20, f"unexpected drop fraction {drop_frac}"

    print("KERNEL_OK")
</pallas_src>

<mosaic_0001>
module attributes {stable_mosaic.version = 11 : i64} {
  func.func @_pe_add_dropout_kernel(%arg0: i32, %arg1: memref<1xi32, #tpu.memory_space<smem>>, %arg2: memref<8x1536xf32, #tpu.memory_space<vmem>>, %arg3: memref<8x768xf32, #tpu.memory_space<vmem>>, %arg4: memref<8x1536xf32, #tpu.memory_space<vmem>>) attributes {dimension_semantics = [#tpu.dimension_semantics<parallel>], iteration_bounds = array<i64: 1>, scalar_prefetch = 1 : i64, scratch_operands = 0 : i64, tpu.core_type = #tpu.core_type<tc>, window_params = [{transform_indices = @transform_0, window_bounds = array<i64: 8, 1536>}, {transform_indices = @transform_1, window_bounds = array<i64: 8, 768>}, {transform_indices = @transform_2, window_bounds = array<i64: 8, 1536>}]} {
    %c0 = arith.constant 0 : index
    %c0_0 = arith.constant 0 : index
    %0 = vector.load %arg2[%c0, %c0_0] : memref<8x1536xf32, #tpu.memory_space<vmem>>, vector<8x1536xf32>
    %c0_1 = arith.constant 0 : index
    %c0_2 = arith.constant 0 : index
    %1 = vector.load %arg3[%c0_1, %c0_2] : memref<8x768xf32, #tpu.memory_space<vmem>>, vector<8x768xf32>
    %2 = tpu.concatenate %1, %1 in 1 : vector<8x768xf32>, vector<8x768xf32> -> vector<8x1536xf32>
    %3 = arith.addf %0, %2 : vector<8x1536xf32>
    %c0_3 = arith.constant 0 : index
    %c0_4 = arith.constant 0 : index
    %4 = vector.load %arg4[%c0_3, %c0_4] : memref<8x1536xf32, #tpu.memory_space<vmem>>, vector<8x1536xf32>
    tpu.vector_store %arg4[%c0_3, %c0_4], %3 {strides = array<i32>} : memref<8x1536xf32, #tpu.memory_space<vmem>>, vector<8x1536xf32>,
    return
  }
  func.func @transform_0(%arg0: i32, %arg1: memref<1xi32, #tpu.memory_space<smem>>) -> (i32, i32) {
    %c0_i32 = arith.constant 0 : i32
    %c0_i32_0 = arith.constant 0 : i32
    return %arg0, %c0_i32 : i32, i32
  }
  func.func @transform_1(%arg0: i32, %arg1: memref<1xi32, #tpu.memory_space<smem>>) -> (i32, i32) {
    %c0_i32 = arith.constant 0 : i32
    %c0_i32_0 = arith.constant 0 : i32
    return %arg0, %c0_i32 : i32, i32
  }
  func.func @transform_2(%arg0: i32, %arg1: memref<1xi32, #tpu.memory_space<smem>>) -> (i32, i32) {
    %c0_i32 = arith.constant 0 : i32
    %c0_i32_0 = arith.constant 0 : i32
    return %arg0, %c0_i32 : i32, i32
  }
}

</mosaic_0001>

<llo_original>
// kernel: tpu_custom_call.1
$region0: #{tpu_custom_call.1}
  #allocation0 [shape = 'u32[]', space=smem, size = 0x4, offset = 0x4, fixed_abs, tag = 'smem constant byte address 0x4 - core index']
  #allocation1 [shape = 'u32[144,128]{1,0:T(1,128)}', space=vmem, size = 0x12000, scoped, tag = 'internal scratch']
  #allocation2 [shape = 's32[1]{0}', space=sflag, size = 0x4, scoped, tag = 'scoped memory for tpu_custom_call.1']
  #allocation3 [shape = 's32[1]{0:T(128)S(6)}', space=smem, size = 0x200, scoped, tag = 'prefetched SMEM operand 0']
  %s0 = inlined_call_operand.<no memory space> [shape: s32[1], index: 0, kind: input, shape index: {}]
  %s1 = inlined_call_operand.hbm [shape: f32[8,1536], index: 1, kind: input, shape index: {}]
  %s2 = inlined_call_operand.hbm [shape: f32[8,768], index: 2, kind: input, shape index: {}]
  %s3 = inlined_call_operand.hbm [shape: f32[8,1536], index: 3, kind: output, shape index: {}]
  %s4 = sld [smem:[#allocation0]]
  $region26: #{tpu_custom_call.1} parent=0
    _
  %s6 = ssub.s32 1, %s4
  %s7 = scalar_select 0, %s6, %s4
  %8 = sst [smem:[#allocation3]] %s0
  $region1: #{tpu_custom_call.1} parent=0
    #allocation4 [shape = 'u8[49152]{0}', space=vmem, size = 0xc000, scoped, tag = 'input window, operand 1, single buffered']
    #allocation5 [shape = 's32[1]{0}', space=sflag, size = 0x4, scoped, tag = 'scoped memory for tpu_custom_call.1']
    #allocation6 [shape = 's32[1]{0}', space=sflag, size = 0x4, scoped, tag = 'scoped memory for tpu_custom_call.1']
    #allocation7 [shape = 'u8[24576]{0}', space=vmem, size = 0x6000, scoped, tag = 'input window, operand 2, single buffered']
    #allocation8 [shape = 's32[1]{0}', space=sflag, size = 0x4, scoped, tag = 'scoped memory for tpu_custom_call.1']
    #allocation9 [shape = 'u8[49152]{0}', space=vmem, size = 0xc000, scoped, tag = 'output window, operand 0, single buffered']
    %9 = vsyncpa [#allocation5], 0
    %10 = vsyncpa [#allocation8], 0
    %11 = vsyncpa [#allocation6], 0
    // Predicated region
    $region2: #{tpu_custom_call.1} parent=1 // pred_check
      _
    $region3: #{tpu_custom_call.1} parent=1 // pred_check_branch
      %13 = sbr.rel (0) target = $region5
    $region4: #{tpu_custom_call.1} parent=1 // pred_region
      %s15 = ssub.s32 1536, 1536
      %16 = vsyncadd [#allocation5], %s15
      %s18 = sshll.u32 [#allocation4], 4
      %s19 = int_to_ptr.vmem [resolvable:$true] %s18
      %21 = dma.hbm_to_vmem [thread:$0]  %s1, 1536, %s19, [#allocation5]
    $region5: #{tpu_custom_call.1} parent=1 // pred_fallthru
      _
    // Predicated region
    $region6: #{tpu_custom_call.1} parent=1 // pred_check
      _
    $region7: #{tpu_custom_call.1} parent=1 // pred_check_branch
      %23 = sbr.rel (0) target = $region9
    $region8: #{tpu_custom_call.1} parent=1 // pred_region
      %s25 = ssub.s32 768, 768
      %26 = vsyncadd [#allocation8], %s25
      %s28 = sshll.u32 [#allocation7], 4
      %s29 = int_to_ptr.vmem [resolvable:$true] %s28
      %31 = dma.hbm_to_vmem [thread:$0]  %s2, 768, %s29, [#allocation8]
    $region9: #{tpu_custom_call.1} parent=1 // pred_fallthru
      _
    // Predicated region
    $region10: #{tpu_custom_call.1} parent=1 // pred_check
      _
    $region11: #{tpu_custom_call.1} parent=1 // pred_check_branch
      %33 = sbr.rel (0) target = $region13
    $region12: #{tpu_custom_call.1} parent=1 // pred_region
      %34 = dma.done [#allocation5], 1536
    $region13: #{tpu_custom_call.1} parent=1 // pred_fallthru
      _
    // Predicated region
    $region14: #{tpu_custom_call.1} parent=1 // pred_check
      _
    $region15: #{tpu_custom_call.1} parent=1 // pred_check_branch
      %36 = sbr.rel (0) target = $region17
    $region16: #{tpu_custom_call.1} parent=1 // pred_region
      %37 = dma.done [#allocation8], 768
    $region17: #{tpu_custom_call.1} parent=1 // pred_fallthru
      _
    %v38 = vld [vmem:[#allocation4] sm:$0xff]
    %v39 = vld [vmem:[#allocation4 + $0x8] sm:$0xff]
    %v40 = vld [vmem:[#allocation4 + $0x10] sm:$0xff]
    %v41 = vld [vmem:[#allocation4 + $0x18] sm:$0xff]
    %v42 = vld [vmem:[#allocation4 + $0x20] sm:$0xff]
    %v43 = vld [vmem:[#allocation4 + $0x28] sm:$0xff]
    %v44 = vld [vmem:[#allocation4 + $0x30] sm:$0xff]
    %v45 = vld [vmem:[#allocation4 + $0x38] sm:$0xff]
    %v46 = vld [vmem:[#allocation4 + $0x40] sm:$0xff]
    %v47 = vld [vmem:[#allocation4 + $0x48] sm:$0xff]
    %v48 = vld [vmem:[#allocation4 + $0x50] sm:$0xff]
    %v49 = vld [vmem:[#allocation4 + $0x58] sm:$0xff]
    %v50 = vld [vmem:[#allocation7] sm:$0xff]
    %v51 = vld [vmem:[#allocation7 + $0x8] sm:$0xff]
    %v52 = vld [vmem:[#allocation7 + $0x10] sm:$0xff]
    %v53 = vld [vmem:[#allocation7 + $0x18] sm:$0xff]
    %v54 = vld [vmem:[#allocation7 + $0x20] sm:$0xff]
    %v55 = vld [vmem:[#allocation7 + $0x28] sm:$0xff]
    %v56 = vadd.f32 %v38, %v50
    %v57 = vadd.f32 %v39, %v51
    %v58 = vadd.f32 %v40, %v52
    %v59 = vadd.f32 %v41, %v53
    %v60 = vadd.f32 %v42, %v54
    %v61 = vadd.f32 %v43, %v55
    %v62 = vadd.f32 %v44, %v50
    %v63 = vadd.f32 %v45, %v51
    %v64 = vadd.f32 %v46, %v52
    %v65 = vadd.f32 %v47, %v53
    %v66 = vadd.f32 %v48, %v54
    %v67 = vadd.f32 %v49, %v55
    %68 = vst [vmem:[#allocation9] sm:$0xff] %v56
    %69 = vst [vmem:[#allocation9 + $0x8] sm:$0xff] %v57
    %70 = vst [vmem:[#allocation9 + $0x10] sm:$0xff] %v58
    %71 = vst [vmem:[#allocation9 + $0x18] sm:$0xff] %v59
    %72 = vst [vmem:[#allocation9 + $0x20] sm:$0xff] %v60
    %73 = vst [vmem:[#allocation9 + $0x28] sm:$0xff] %v61
    %74 = vst [vmem:[#allocation9 + $0x30] sm:$0xff] %v62
    %75 = vst [vmem:[#allocation9 + $0x38] sm:$0xff] %v63
    %76 = vst [vmem:[#allocation9 + $0x40] sm:$0xff] %v64
    %77 = vst [vmem:[#allocation9 + $0x48] sm:$0xff] %v65
    %78 = vst [vmem:[#allocation9 + $0x50] sm:$0xff] %v66
    %79 = vst [vmem:[#allocation9 + $0x58] sm:$0xff] %v67
    // Predicated region
    $region18: #{tpu_custom_call.1} parent=1 // pred_check
      _
    $region19: #{tpu_custom_call.1} parent=1 // pred_check_branch
      %81 = sbr.rel (0) target = $region21
    $region20: #{tpu_custom_call.1} parent=1 // pred_region
      %s83 = ssub.s32 1536, 1536
      %84 = vsyncadd [#allocation6], %s83
      %s86 = sshll.u32 [#allocation9], 4
      %s87 = int_to_ptr.vmem [resolvable:$true] %s86
      %89 = dma.vmem_to_hbm [thread:$0]  %s87, 1536, %s3, [#allocation6]
    $region21: #{tpu_custom_call.1} parent=1 // pred_fallthru
      _
    // Predicated region
    $region22: #{tpu_custom_call.1} parent=1 // pred_check
      _
    $region23: #{tpu_custom_call.1} parent=1 // pred_check_branch
      %91 = sbr.rel (0) target = $region25
    $region24: #{tpu_custom_call.1} parent=1 // pred_region
      %92 = dma.done [#allocation6], 1536
    $region25: #{tpu_custom_call.1} parent=1 // pred_fallthru
      _
    %93 = vsyncpa [#allocation5], 1
    %94 = vsyncpa [#allocation8], 1
    %95 = vsyncpa [#allocation6], 1

</llo_original>
